<compile_context>
chip_gen: v6e
topology: v6e:2x2x1
jax: 0.10.0
libtpu: 0.0.40
codegen_flags: <defaults>
</compile_context>

<pallas_src>
import math

import jax
import jax.numpy as jnp
from jax.experimental import pallas as pl
from jax.experimental.pallas import tpu as pltpu

FACTOR = 1.0
TWO_PI = 2.0 * math.pi
FACTOR_PI = FACTOR * TWO_PI          # 2*pi*factor (used by the jnp.sin reference)
OFFSET = 0.5 / FACTOR

# Odd-polynomial coefficients for  sin(2*pi*s) / (2*pi*factor) == sum_k c_k * s^(2k+1),
# Taylor through s^11.  After reflection |2*pi*s| <= pi/2, so truncation error < 1e-8,
# far inside the 1e-5 tolerance vs the jnp.sin reference.
_COEFFS = tuple(
    (-1.0) ** k * TWO_PI ** (2 * k) / math.factorial(2 * k + 1) / FACTOR
    for k in range(6)
)

# TODO(synk): pre_activation is None by default (activation_to_callable(None) -> None);
# a non-None pre-activation would just be one more elementwise op fused into the kernel.

_LANES = 128
# ~4 MiB blocks: (in + out) x double-buffering = 16 MiB of I/O buffers, which amortizes
# the ~0.35 us per-grid-step overhead while staying well under the 48 MiB VMEM cap
# (v7x only has 64 MiB physical VMEM and Mosaic needs internal scratch headroom).
_TARGET_BLOCK_BYTES = 4 << 20
_VMEM_CAP_BYTES = 48 << 20


def _sinstep_f32(xf):
    """y = x - sin(2*pi*factor*x)/(2*pi*factor), evaluated without jnp.sin (f32 in/out)."""
    t = xf if FACTOR == 1.0 else xf * FACTOR
    # Range reduction in "turns": r = t - round(t) in [-0.5, 0.5].  floor(t+0.5) is
    # round-half-up; any rounding choice at .5 gives the same sine by periodicity.
    r = t - jnp.floor(t + 0.5)
    # Reflect onto |s| <= 0.25 (so |2*pi*s| <= pi/2) using sin(pi - u) = sin(u),
    # sin(-pi - u) = sin(u):  if |r| > 0.25, s = copysign(0.5, r) - r.
    half = jnp.where(r < 0.0, -0.5, 0.5)
    s = jnp.where(jnp.abs(r) > 0.25, half - r, r)
    # Horner in s^2, coefficients already divided by 2*pi*factor.
    s2 = s * s
    p = _COEFFS[5]
    p = p * s2 + _COEFFS[4]
    p = p * s2 + _COEFFS[3]
    p = p * s2 + _COEFFS[2]
    p = p * s2 + _COEFFS[1]
    p = p * s2 + _COEFFS[0]
    return xf - p * s


def _sinstep_kernel(x_ref, o_ref):
    # TODO(synk): for bf16 inputs on v6e/v7x some of this could stay in packed bf16
    # (2x VALU rate); kept fully in f32 for accuracy on every generation (incl. v5e).
    xf = x_ref[...].astype(jnp.float32)
    o_ref[...] = _sinstep_f32(xf).astype(o_ref.dtype)


def _round_up(a: int, b: int) -> int:
    return -(-a // b) * b


def _choose_row_tile(rows: int, sublane: int, itemsize: int) -> int:
    """Sublane-aligned row tile: as big as the block budget allows, but >= 4 grid steps."""
    max_rows = max(
        sublane,
        (_TARGET_BLOCK_BYTES // (_LANES * itemsize)) // sublane * sublane,
    )
    if rows <= sublane:
        # Tiny input: single block spanning the full row dim (allowed even if < sublane).
        return rows
    # Aim for >= 4 grid steps: keeps both v7x TensorCores fed *and* leaves an i+1 block
    # for the pipeline to prefetch per core (near-zero cost on single-TC v5e/v6e).
    quarter = _round_up(pl.cdiv(rows, 4), sublane)
    return min(max_rows, max(sublane, quarter))


def _sinstep_2d(x2d: jax.Array) -> jax.Array:
    rows = x2d.shape[0]
    itemsize = jnp.dtype(x2d.dtype).itemsize
    # dtype-aware sublane tile: 8 for 4-byte, 16 for 2-byte, 32 for 1-byte dtypes.
    sublane = max(8, 32 // itemsize)
    row_tile = _choose_row_tile(rows, sublane, itemsize)
    grid = (pl.cdiv(rows, row_tile),)

    block_bytes = row_tile * _LANES * itemsize
    # in + out, double-buffered, plus room for block-sized f32 intermediates;
    # capped at 48 MiB so the request is always valid on v7x (64 MiB physical VMEM).
    vmem_limit = min(_VMEM_CAP_BYTES, max(16 << 20, 8 * block_bytes))

    # NOTE: input_output_aliases={0: 0} would halve the HBM footprint but only helps
    # when the caller donates the buffer; skipped here (low priority per review).
    return pl.pallas_call(
        _sinstep_kernel,
        out_shape=jax.ShapeDtypeStruct((rows, _LANES), x2d.dtype),
        grid_spec=pltpu.PrefetchScalarGridSpec(
            num_scalar_prefetch=0,
            grid=grid,
            in_specs=[pl.BlockSpec((row_tile, _LANES), lambda i: (i, 0))],
            out_specs=pl.BlockSpec((row_tile, _LANES), lambda i: (i, 0)),
        ),
        compiler_params=pltpu.CompilerParams(
            dimension_semantics=("parallel",),
            vmem_limit_bytes=vmem_limit,
        ),
    )(x2d)


def sinstep(x: jax.Array) -> jax.Array:
    """Elementwise SinStep: y = x + sin((x + offset) * 2*pi*factor) / (2*pi*factor)."""
    orig_shape = x.shape
    n = x.size
    if n == 0:
        return x

    x_flat = x.reshape(-1)
    n_main = n - (n % _LANES)

    pieces = []
    if n_main:
        rows = n_main // _LANES
        x_main = x_flat if n_main == n else x_flat[:n_main]
        y_main = _sinstep_2d(x_main.reshape(rows, _LANES))
        pieces.append(y_main.reshape(-1))
    if n != n_main:
        # <128-element ragged tail handled in plain jnp: negligible work, and it avoids
        # a whole-array pad + output slice (each a full extra HBM pass on this HBM-bound op).
        tail = x_flat[n_main:]
        pieces.append(_sinstep_f32(tail.astype(jnp.float32)).astype(x.dtype))

    out_flat = pieces[0] if len(pieces) == 1 else jnp.concatenate(pieces)
    return out_flat.reshape(orig_shape)


def _reference(x: jax.Array) -> jax.Array:
    xf = x.astype(jnp.float32)
    y = xf + jnp.sin((xf + OFFSET) * FACTOR_PI) / FACTOR_PI
    return y.astype(x.dtype)


if __name__ == "__main__":
    key = jax.random.PRNGKey(0)
    k1, k2 = jax.random.split(key)

    # NCHW input, as in the PyTorch module's typical usage.
    x = jax.random.normal(k1, (2, 4, 16, 16), dtype=jnp.float32) * 3.0
    y = sinstep(x)
    jax.block_until_ready(y)
    y_ref = _reference(x)
    assert y.shape == x.shape and y.dtype == x.dtype
    assert jnp.allclose(y, y_ref, atol=1e-5, rtol=1e-5), "mismatch vs reference (NCHW)"

    # Ragged size (not a multiple of 128): exercises the no-pad main + jnp-tail path.
    xr = jax.random.normal(k2, (1000,), dtype=jnp.float32) * 3.0
    yr = sinstep(xr)
    jax.block_until_ready(yr)
    assert jnp.allclose(yr, _reference(xr), atol=1e-5, rtol=1e-5), "mismatch vs reference (ragged)"

    print("KERNEL_OK")
</pallas_src>

<mosaic_0001>
module attributes {stable_mosaic.version = 11 : i64} {
  func.func @_sinstep_kernel(%arg0: i32, %arg1: memref<8x128xf32, #tpu.memory_space<vmem>>, %arg2: memref<8x128xf32, #tpu.memory_space<vmem>>) attributes {dimension_semantics = [#tpu.dimension_semantics<parallel>], iteration_bounds = array<i64: 2>, scalar_prefetch = 0 : i64, scratch_operands = 0 : i64, tpu.core_type = #tpu.core_type<tc>, window_params = [{transform_indices = @transform_0, window_bounds = array<i64: 8, 128>}, {transform_indices = @transform_1, window_bounds = array<i64: 8, 128>}]} {
    %c0 = arith.constant 0 : index
    %c0_0 = arith.constant 0 : index
    %0 = vector.load %arg1[%c0, %c0_0] : memref<8x128xf32, #tpu.memory_space<vmem>>, vector<8x128xf32>
    %cst = arith.constant 5.000000e-01 : f32
    %1 = vector.broadcast %cst : f32 to vector<8x128xf32>
    %2 = arith.addf %0, %1 : vector<8x128xf32>
    %3 = math.floor %2 : vector<8x128xf32>
    %4 = arith.subf %0, %3 : vector<8x128xf32>
    %cst_1 = arith.constant 0.000000e+00 : f32
    %5 = vector.broadcast %cst_1 : f32 to vector<8x128xf32>
    %6 = arith.cmpf olt, %4, %5 : vector<8x128xf32>
    %cst_2 = arith.constant -5.000000e-01 : f32
    %cst_3 = arith.constant 5.000000e-01 : f32
    %7 = vector.broadcast %cst_2 : f32 to vector<8x128xf32>
    %8 = vector.broadcast %cst_3 : f32 to vector<8x128xf32>
    %9 = arith.select %6, %7, %8 : vector<8x128xi1>, vector<8x128xf32>
    %10 = math.absf %4 : vector<8x128xf32>
    %cst_4 = arith.constant 2.500000e-01 : f32
    %11 = vector.broadcast %cst_4 : f32 to vector<8x128xf32>
    %12 = arith.cmpf ogt, %10, %11 : vector<8x128xf32>
    %13 = arith.subf %9, %4 : vector<8x128xf32>
    %14 = arith.select %12, %13, %4 : vector<8x128xi1>, vector<8x128xf32>
    %15 = arith.mulf %14, %14 : vector<8x128xf32>
    %cst_5 = arith.constant -2.4023869 : f32
    %16 = vector.broadcast %cst_5 : f32 to vector<8x128xf32>
    %17 = arith.mulf %16, %15 : vector<8x128xf32>
    %cst_6 = arith.constant 6.69384909 : f32
    %18 = vector.broadcast %cst_6 : f32 to vector<8x128xf32>
    %19 = arith.addf %17, %18 : vector<8x128xf32>
    %20 = arith.mulf %19, %15 : vector<8x128xf32>
    %cst_7 = arith.constant -12.2081165 : f32
    %21 = vector.broadcast %cst_7 : f32 to vector<8x128xf32>
    %22 = arith.addf %20, %21 : vector<8x128xf32>
    %23 = arith.mulf %22, %15 : vector<8x128xf32>
    %cst_8 = arith.constant 12.9878788 : f32
    %24 = vector.broadcast %cst_8 : f32 to vector<8x128xf32>
    %25 = arith.addf %23, %24 : vector<8x128xf32>
    %26 = arith.mulf %25, %15 : vector<8x128xf32>
    %cst_9 = arith.constant -6.57973623 : f32
    %27 = vector.broadcast %cst_9 : f32 to vector<8x128xf32>
    %28 = arith.addf %26, %27 : vector<8x128xf32>
    %29 = arith.mulf %28, %15 : vector<8x128xf32>
    %cst_10 = arith.constant 1.000000e+00 : f32
    %30 = vector.broadcast %cst_10 : f32 to vector<8x128xf32>
    %31 = arith.addf %29, %30 : vector<8x128xf32>
    %32 = arith.mulf %31, %14 : vector<8x128xf32>
    %33 = arith.subf %0, %32 : vector<8x128xf32>
    %c0_11 = arith.constant 0 : index
    %c0_12 = arith.constant 0 : index
    %34 = vector.load %arg2[%c0_11, %c0_12] : memref<8x128xf32, #tpu.memory_space<vmem>>, vector<8x128xf32>
    tpu.vector_store %arg2[%c0_11, %c0_12], %33 {strides = array<i32>} : memref<8x128xf32, #tpu.memory_space<vmem>>, vector<8x128xf32>,
    return
  }
  func.func @transform_0(%arg0: i32) -> (i32, i32) {
    %c0_i32 = arith.constant 0 : i32
    %c0_i32_0 = arith.constant 0 : i32
    return %arg0, %c0_i32 : i32, i32
  }
  func.func @transform_1(%arg0: i32) -> (i32, i32) {
    %c0_i32 = arith.constant 0 : i32
    %c0_i32_0 = arith.constant 0 : i32
    return %arg0, %c0_i32 : i32, i32
  }
}

</mosaic_0001>

<llo_original>
// kernel: tpu_custom_call.1
$region0: #{tpu_custom_call.1}
  #allocation0 [shape = 'u32[]', space=smem, size = 0x4, offset = 0x4, fixed_abs, tag = 'smem constant byte address 0x4 - core index']
  #allocation1 [shape = 'u32[144,128]{1,0:T(1,128)}', space=vmem, size = 0x12000, scoped, tag = 'internal scratch']
  %s0 = inlined_call_operand.hbm [shape: f32[16,128], index: 0, kind: input, shape index: {}]
  %s1 = inlined_call_operand.hbm [shape: f32[16,128], index: 1, kind: output, shape index: {}]
  %s2 = sld [smem:[#allocation0]]
  $region41: #{tpu_custom_call.1} parent=0
    _
  %s4 = ssub.s32 1, %s2
  %s5 = scalar_select 0, %s4, %s2
  $region1: #{tpu_custom_call.1} parent=0
    #allocation2 [shape = 'u8[8192]{0}', space=vmem, size = 0x2000, scoped, tag = 'input window, operand 0']
    #allocation3 [shape = 's32[2]{0}', space=sflag, size = 0x8, scoped, tag = 'scoped memory for tpu_custom_call.1']
    #allocation4 [shape = 's32[2]{0}', space=sflag, size = 0x8, scoped, tag = 'scoped memory for tpu_custom_call.1']
    #allocation5 [shape = 'u8[8192]{0}', space=vmem, size = 0x2000, scoped, tag = 'output window, operand 0']
    %6 = vsyncpa [#allocation3], 0
    %s7 = scalar_lea.sflag [#allocation3], 1
    %8 = vsyncpa %s7, 0
    %9 = vsyncpa [#allocation4], 0
    %s10 = scalar_lea.sflag [#allocation4], 1
    %11 = vsyncpa %s10, 0
    loop: start=0, step=1, limit=4
    $region2: #{tpu_custom_call.1} parent=1 // loop_pre_header
      _
    $region3: #{tpu_custom_call.1} parent=1 // loop_header
      %s13 = sphi 0, %s17
      %p14 = scmp.ge.s32.totalorder %s13, 4
      %s23 = sphi 0, %s25
      %s26 = sphi 0, %s23
      %s27 = sphi 0, %s26
      %s43 = sphi 0, %s27
      %s49 = sphi 0, %s51
      %s52 = sphi 0, %s49
      %s53 = sphi 0, %s52
      %s69 = sphi 0, %s53
    $region4: #{tpu_custom_call.1} parent=1 // loop_header_branch
      %16 = sbr.rel (%p14) target = $region8
    $region5: #{tpu_custom_call.1} parent=1 // loop_body
      %s18 = ssub.s32 %s13, 1
      %s19 = ssub.s32 %s13, 2
      %s20 = sadd.s32 %s13, 1
      %s21 = ssub.s32 %s13, %s20
      %p22 = scmp.eq.s32.totalorder %s21, 0
      %s24 = sadd.s32 %s23, 1
      %s25 = scalar_select %p22, %s23, %s24
      %p28 = pneg %p22
      %p29 = scmp.eq.s32.totalorder %s13, 1
      %p30 = por %p28, %p29
      %p31 = scmp.ne.s32.totalorder %s23, %s26
      %p32 = scmp.eq.s32.totalorder %s13, 0
      %p33 = por %p31, %p32
      %p34 = scmp.ne.s32.totalorder %s23, %s26
      %p35 = scmp.eq.s32.totalorder %s18, 1
      %p36 = por %p34, %p35
      %p37 = scmp.ne.s32.totalorder %s26, %s27
      %p38 = scmp.eq.s32.totalorder %s18, 0
      %p39 = por %p37, %p38
      %p40 = scmp.ne.s32.totalorder %s26, %s27
      %p41 = scmp.eq.s32.totalorder %s19, 1
      %p42 = por %p40, %p41
      %p44 = scmp.ne.s32.totalorder %s27, %s43
      %p45 = scmp.eq.s32.totalorder %s19, 0
      %p46 = por %p44, %p45
      %s47 = ssub.s32 %s13, %s20
      %p48 = scmp.eq.s32.totalorder %s47, 0
      %s50 = sadd.s32 %s49, 1
      %s51 = scalar_select %p48, %s49, %s50
      %p54 = pneg %p48
      %p55 = scmp.eq.s32.totalorder %s13, 1
      %p56 = por %p54, %p55
      %p57 = scmp.ne.s32.totalorder %s49, %s52
      %p58 = scmp.eq.s32.totalorder %s13, 0
      %p59 = por %p57, %p58
      %p60 = scmp.ne.s32.totalorder %s49, %s52
      %p61 = scmp.eq.s32.totalorder %s18, 1
      %p62 = por %p60, %p61
      %p63 = scmp.ne.s32.totalorder %s52, %s53
      %p64 = scmp.eq.s32.totalorder %s18, 0
      %p65 = por %p63, %p64
      %p66 = scmp.ne.s32.totalorder %s52, %s53
      %p67 = scmp.eq.s32.totalorder %s19, 1
      %p68 = por %p66, %p67
      %p70 = scmp.ne.s32.totalorder %s53, %s69
      %p71 = scmp.eq.s32.totalorder %s19, 0
      %p72 = por %p70, %p71
      %p73 = scmp.le.s32.totalorder 1, %s13
      %p74 = scmp.lt.s32.totalorder %s13, 3
      %p75 = pnand %p73, %p74
      %p76 = pneg %p75
      // Predicated region
      $region9: #{tpu_custom_call.1} parent=5 // pred_check
        _
      $region10: #{tpu_custom_call.1} parent=5 // pred_check_branch
        %78 = sbr.rel (%p75) target = $region12
      $region11: #{tpu_custom_call.1} parent=5 // pred_region
        %s79 = ssub.s32 %s13, 1
      $region12: #{tpu_custom_call.1} parent=5 // pred_fallthru
        _
      %p80 = scmp.lt.s32.totalorder %s13, 2
      // Predicated region
      $region13: #{tpu_custom_call.1} parent=5 // pred_check
        %p81 = pneg %p80
      $region14: #{tpu_custom_call.1} parent=5 // pred_check_branch
        %83 = sbr.rel (%p81) target = $region16
      $region15: #{tpu_custom_call.1} parent=5 // pred_region
        // Predicated region
        $region17: #{tpu_custom_call.1} parent=15 // pred_check
          %p84 = pneg %p33
        $region18: #{tpu_custom_call.1} parent=15 // pred_check_branch
          %86 = sbr.rel (%p84) target = $region20
        $region19: #{tpu_custom_call.1} parent=15 // pred_region
          %s87 = sand.u32 %s23, 1
          %s88 = scalar_lea.sflag [#allocation3], %s87
          %s89 = sand.u32 %s23, 1
          %s90 = smul.addr %s89, 8
          %s91 = scalar_lea.vmem [#allocation2], %s90
          %s93 = ssub.s32 128, 128
          %94 = vsyncadd %s88, %s93
          %s95 = smul.addr %s13, 128
          %s96 = scalar_lea.hbm %s0, %s95
          %s98 = sshll.u32 %s91, 4
          %s99 = int_to_ptr.vmem [resolvable:$true] %s98
          %101 = dma.hbm_to_vmem [thread:$0]  %s96, 128, %s99, %s88
        $region20: #{tpu_custom_call.1} parent=15 // pred_fallthru
          _
      $region16: #{tpu_custom_call.1} parent=5 // pred_fallthru
        _
      %p102 = scmp.le.s32.totalorder 1, %s13
      %p103 = scmp.lt.s32.totalorder %s13, 3
      %p104 = pnand %p102, %p103
      %p105 = pneg %p104
      // Predicated region
      $region21: #{tpu_custom_call.1} parent=5 // pred_check
        _
      $region22: #{tpu_custom_call.1} parent=5 // pred_check_branch
        %107 = sbr.rel (%p104) target = $region24
      $region23: #{tpu_custom_call.1} parent=5 // pred_region
        %s108 = ssub.s32 %s13, 1
        %s109 = sand.u32 %s26, 1
        %s110 = scalar_lea.sflag [#allocation3], %s109
        %s111 = sand.u32 %s26, 1
        %s112 = smul.addr %s111, 8
        %s113 = scalar_lea.vmem [#allocation2], %s112
        // Predicated region
        $region25: #{tpu_custom_call.1} parent=23 // pred_check
          %p114 = pneg %p39
        $region26: #{tpu_custom_call.1} parent=23 // pred_check_branch
          %116 = sbr.rel (%p114) target = $region28
        $region27: #{tpu_custom_call.1} parent=23 // pred_region
          %117 = dma.done %s110, 128
        $region28: #{tpu_custom_call.1} parent=23 // pred_fallthru
          _
        %s118 = sand.u32 %s26, 1
        %s119 = scalar_lea.sflag [#allocation3], %s118
        %s120 = sand.u32 %s26, 1
        %s121 = smul.addr %s120, 8
        %s122 = scalar_lea.vmem [#allocation2], %s121
        %p123 = pneg %p39
        %p124 = pneg %p36
        %p125 = pneg %p65
        %p126 = pneg %p62
        %s127 = sand.u32 %s52, 1
        %s128 = scalar_lea.sflag [#allocation4], %s127
        %s129 = sand.u32 %s52, 1
        %s130 = smul.addr %s129, 8
        %s131 = scalar_lea.vmem [#allocation5], %s130
        %v132 = vld [vmem:[%s113] sm:$0xff]
        %v133 = vadd.f32 %v132, 0.5
        %v134 = vfloor.f32 %v133
        %v135 = vsub.f32 %v132, %v134
        %vm136 = vcmp.lt.f32.partialorder %v135, 0.0
        %v137 = vsel %vm136, -0.5, 0.5
        %v138 = vand.u32 2147483647, %v135
        %vm139 = vcmp.gt.f32.partialorder %v138, 0.25
        %v140 = vsub.f32 %v137, %v135
        %v141 = vsel %vm139, %v140, %v135
        %v142 = vmul.f32 %v141, %v141
        %v143 = vmul.f32 %v142, -2.402387
        %v144 = vadd.f32 %v143, 6.693849
        %v145 = vmul.f32 %v144, %v142
        %v146 = vadd.f32 %v145, -12.208117
        %v147 = vmul.f32 %v146, %v142
        %v148 = vadd.f32 %v147, 12.987879
        %v149 = vmul.f32 %v148, %v142
        %v150 = vadd.f32 %v149, -6.579736
        %v151 = vmul.f32 %v150, %v142
        %v152 = vadd.f32 %v151, 1.0
        %v153 = vmul.f32 %v152, %v141
        %v154 = vsub.f32 %v132, %v153
        %155 = vst [vmem:[%s131] sm:$0xff] %v154
        %s156 = sand.u32 %s52, 1
        %s157 = scalar_lea.sflag [#allocation4], %s156
        %s158 = sand.u32 %s52, 1
        %s159 = smul.addr %s158, 8
        %s160 = scalar_lea.vmem [#allocation5], %s159
        // Predicated region
        $region29: #{tpu_custom_call.1} parent=23 // pred_check
          %p161 = pneg %p62
        $region30: #{tpu_custom_call.1} parent=23 // pred_check_branch
          %163 = sbr.rel (%p161) target = $region32
        $region31: #{tpu_custom_call.1} parent=23 // pred_region
          %s165 = ssub.s32 128, 128
          %166 = vsyncadd %s157, %s165
          %s167 = smul.addr %s18, 128
          %s168 = scalar_lea.hbm %s1, %s167
          %s170 = sshll.u32 %s160, 4
          %s171 = int_to_ptr.vmem [resolvable:$true] %s170
          %173 = dma.vmem_to_hbm [thread:$0]  %s171, 128, %s168, %s157
        $region32: #{tpu_custom_call.1} parent=23 // pred_fallthru
          _
      $region24: #{tpu_custom_call.1} parent=5 // pred_fallthru
        _
      %p174 = scmp.le.s32.totalorder 2, %s13
      // Predicated region
      $region33: #{tpu_custom_call.1} parent=5 // pred_check
        %p175 = pneg %p174
      $region34: #{tpu_custom_call.1} parent=5 // pred_check_branch
        %177 = sbr.rel (%p175) target = $region36
      $region35: #{tpu_custom_call.1} parent=5 // pred_region
        %s178 = ssub.s32 %s13, 2
        // Predicated region
        $region37: #{tpu_custom_call.1} parent=35 // pred_check
          %p179 = pneg %p68
        $region38: #{tpu_custom_call.1} parent=35 // pred_check_branch
          %181 = sbr.rel (%p179) target = $region40
        $region39: #{tpu_custom_call.1} parent=35 // pred_region
          %s182 = sand.u32 %s53, 1
          %s183 = scalar_lea.sflag [#allocation4], %s182
          %s184 = sand.u32 %s53, 1
          %s185 = smul.addr %s184, 8
          %s186 = scalar_lea.vmem [#allocation5], %s185
          %187 = dma.done %s183, 128
        $region40: #{tpu_custom_call.1} parent=35 // pred_fallthru
          _
      $region36: #{tpu_custom_call.1} parent=5 // pred_fallthru
        _
    $region6: #{tpu_custom_call.1} parent=1 // loop_footer
      %s17 = sadd.s32 1, %s13
    $region7: #{tpu_custom_call.1} parent=1 // loop_footer_branch
      %12 = sbr.rel target = $region3
    $region8: #{tpu_custom_call.1} parent=1 // loop_exit
      _
    %188 = vsyncpa [#allocation3], 1
    %s189 = scalar_lea.sflag [#allocation3], 1
    %190 = vsyncpa %s189, 1
    %191 = vsyncpa [#allocation4], 1
    %s192 = scalar_lea.sflag [#allocation4], 1
    %193 = vsyncpa %s192, 1

</llo_original>
